<compile_context>
chip_gen: v7x
topology: tpu7x:2x2x1
jax: 0.10.0
libtpu: 0.0.40
codegen_flags: <defaults>
</compile_context>

<pallas_src>
import jax
import jax.numpy as jnp
from jax import lax
from jax.experimental import pallas as pl
from jax.experimental.pallas import tpu as pltpu


_TWO_PI = 6.283185307179586  # Python float -> jaxpr literal, not a captured const


def _normal_noize_kernel(prec_ref, x_ref, bits_ref, o_ref):
    # prec_ref: (1,) f32 in SMEM.  x_ref / o_ref: (2, TR, 128).  bits_ref: (TR, 128) u32.
    scale = prec_ref[0] * (1.0 / 3.0)              # noise std = scale * |x|

    bits = bits_ref[...]                           # one uint32 -> two 16-bit uniforms
    # Put 16 random bits into the top of the f32 mantissa -> value in [1, 2).
    f1 = lax.bitcast_convert_type(((bits >> 16) << 7) | 0x3F800000, jnp.float32)
    f2 = lax.bitcast_convert_type(((bits & 0xFFFF) << 7) | 0x3F800000, jnp.float32)

    u1 = 2.0 - f1                                  # (0, 1], safe for log
    theta = _TWO_PI * (f2 - 1.0)                   # [0, 2*pi)
    r = jnp.sqrt(-2.0 * jnp.log(u1))
    z1 = r * jnp.cos(theta)                        # Box-Muller pair: two independent
    z2 = r * jnp.sin(theta)                        # standard normals per uint32

    x0 = x_ref[0].astype(jnp.float32)
    x1 = x_ref[1].astype(jnp.float32)
    o_ref[0] = (x0 + scale * jnp.abs(x0) * z1).astype(o_ref.dtype)
    o_ref[1] = (x1 + scale * jnp.abs(x1) * z2).astype(o_ref.dtype)


def normal_noize(x, precision, key, *, tile_rows=2048):
    """JAX/Pallas equivalent of NormalNoize(precision).forward(x)."""
    orig_shape = x.shape
    orig_dtype = x.dtype

    flat = x.reshape(-1)
    n = flat.shape[0]

    # Rows of 128 lanes, rounded to an even count (>=16) so the slab splits
    # into two equal halves that share one Box-Muller bits row per element.
    rows = max(16, 2 * pl.cdiv(pl.cdiv(n, 128), 2))
    padded = rows * 128
    if padded != n:        # only shapes not a multiple of 256 elements pay a pad pass
        flat = jnp.pad(flat, (0, padded - n))

    half = rows // 2
    x3 = flat.reshape(2, half, 128)

    tr = min(tile_rows, half)          # half and tile_rows are multiples of 8
    grid = (pl.cdiv(half, tr),)

    # Two 16-bit uniforms per uint32 -> bits array is half the element count.
    bits = jax.random.bits(key, (half, 128), dtype=jnp.uint32)
    prec = jnp.asarray(precision, dtype=jnp.float32).reshape((1,))

    itemsize = jnp.dtype(orig_dtype).itemsize
    cost = pl.CostEstimate(flops=16 * padded,
                           transcendentals=2 * padded,
                           bytes_accessed=padded * (2 * itemsize + 2))

    out = pl.pallas_call(
        _normal_noize_kernel,
        out_shape=jax.ShapeDtypeStruct((2, half, 128), orig_dtype),
        grid=grid,
        in_specs=[pl.BlockSpec(memory_space=pltpu.MemorySpace.SMEM),   # precision scalar
                  pl.BlockSpec((2, tr, 128), lambda i: (0, i, 0)),     # x slab
                  pl.BlockSpec((tr, 128), lambda i: (i, 0))],          # random bits
        out_specs=pl.BlockSpec((2, tr, 128), lambda i: (0, i, 0)),
        compiler_params=pltpu.CompilerParams(
            dimension_semantics=("parallel",)),
        cost_estimate=cost,
    )(prec, x3, bits)

    out = out.reshape(-1)
    if padded != n:
        out = out[:n]
    return out.reshape(orig_shape)


if __name__ == "__main__":
    key = jax.random.PRNGKey(0)
    key_x, key_noise = jax.random.split(key)

    x = jax.random.normal(key_x, (2, 4, 16, 16), dtype=jnp.float32)  # NCHW
    precision = 0.1  # the registered buffer value

    y = normal_noize(x, precision, key_noise)
    y = jax.block_until_ready(y)

    assert y.shape == x.shape and y.dtype == x.dtype
    assert bool(jnp.all(jnp.isfinite(y)))

    # Statistical sanity: (y - x) / (precision*|x|/3) should look ~ N(0, 1).
    std = precision * jnp.abs(x) / 3.0
    z = (y - x) / jnp.where(std > 0, std, 1.0)
    assert abs(float(jnp.mean(z))) < 0.15
    assert abs(float(jnp.std(z)) - 1.0) < 0.2

    print("KERNEL_OK")
</pallas_src>

<mosaic_0001>
module attributes {stable_mosaic.version = 11 : i64} {
  func.func @_normal_noize_kernel(%arg0: i32, %arg1: memref<1xf32, #tpu.memory_space<smem>>, %arg2: memref<2x8x128xf32, #tpu.memory_space<vmem>>, %arg3: memref<8x128xi32, #tpu.memory_space<vmem>>, %arg4: memref<2x8x128xf32, #tpu.memory_space<vmem>>) attributes {dimension_semantics = [#tpu.dimension_semantics<parallel>], iteration_bounds = array<i64: 1>, scalar_prefetch = 0 : i64, scratch_operands = 0 : i64, tpu.core_type = #tpu.core_type<tc>, window_params = [{transform_indices = @transform_0, window_bounds = array<i64: 1>}, {transform_indices = @transform_1, window_bounds = array<i64: 2, 8, 128>}, {transform_indices = @transform_2, window_bounds = array<i64: 8, 128>}, {transform_indices = @transform_3, window_bounds = array<i64: 2, 8, 128>}]} {
    %c0 = arith.constant 0 : index
    %0 = memref.load %arg1[%c0] : memref<1xf32, #tpu.memory_space<smem>>
    %cst = arith.constant 0.333333343 : f32
    %1 = arith.mulf %0, %cst : f32
    %c0_0 = arith.constant 0 : index
    %c0_1 = arith.constant 0 : index
    %2 = vector.load %arg3[%c0_0, %c0_1] : memref<8x128xi32, #tpu.memory_space<vmem>>, vector<8x128xi32>
    %c16_i32 = arith.constant 16 : i32
    %3 = vector.broadcast %c16_i32 : i32 to vector<8x128xi32>
    %4 = arith.shrui %2, %3 : vector<8x128xi32>
    %c7_i32 = arith.constant 7 : i32
    %5 = vector.broadcast %c7_i32 : i32 to vector<8x128xi32>
    %6 = arith.shli %4, %5 : vector<8x128xi32>
    %c1065353216_i32 = arith.constant 1065353216 : i32
    %7 = vector.broadcast %c1065353216_i32 : i32 to vector<8x128xi32>
    %8 = arith.ori %6, %7 : vector<8x128xi32>
    %9 = tpu.bitcast %8 : vector<8x128xi32> -> vector<8x128xf32>
    %c65535_i32 = arith.constant 65535 : i32
    %10 = vector.broadcast %c65535_i32 : i32 to vector<8x128xi32>
    %11 = arith.andi %2, %10 : vector<8x128xi32>
    %c7_i32_2 = arith.constant 7 : i32
    %12 = vector.broadcast %c7_i32_2 : i32 to vector<8x128xi32>
    %13 = arith.shli %11, %12 : vector<8x128xi32>
    %c1065353216_i32_3 = arith.constant 1065353216 : i32
    %14 = vector.broadcast %c1065353216_i32_3 : i32 to vector<8x128xi32>
    %15 = arith.ori %13, %14 : vector<8x128xi32>
    %16 = tpu.bitcast %15 : vector<8x128xi32> -> vector<8x128xf32>
    %cst_4 = arith.constant 2.000000e+00 : f32
    %17 = vector.broadcast %cst_4 : f32 to vector<8x128xf32>
    %18 = arith.subf %17, %9 : vector<8x128xf32>
    %cst_5 = arith.constant 1.000000e+00 : f32
    %19 = vector.broadcast %cst_5 : f32 to vector<8x128xf32>
    %20 = arith.subf %16, %19 : vector<8x128xf32>
    %cst_6 = arith.constant 6.28318548 : f32
    %21 = vector.broadcast %cst_6 : f32 to vector<8x128xf32>
    %22 = arith.mulf %21, %20 : vector<8x128xf32>
    %23 = math.log %18 : vector<8x128xf32>
    %cst_7 = arith.constant -2.000000e+00 : f32
    %24 = vector.broadcast %cst_7 : f32 to vector<8x128xf32>
    %25 = arith.mulf %24, %23 : vector<8x128xf32>
    %26 = math.sqrt %25 : vector<8x128xf32>
    %27 = math.cos %22 : vector<8x128xf32>
    %28 = arith.mulf %26, %27 : vector<8x128xf32>
    %29 = math.sin %22 : vector<8x128xf32>
    %30 = arith.mulf %26, %29 : vector<8x128xf32>
    %c0_8 = arith.constant 0 : index
    %c0_9 = arith.constant 0 : index
    %c0_10 = arith.constant 0 : index
    %31 = vector.load %arg2[%c0_8, %c0_9, %c0_10] : memref<2x8x128xf32, #tpu.memory_space<vmem>>, vector<1x8x128xf32>
    %32 = vector.shape_cast %31 : vector<1x8x128xf32> to vector<8x128xf32>
    %c1 = arith.constant 1 : index
    %c0_11 = arith.constant 0 : index
    %c0_12 = arith.constant 0 : index
    %33 = vector.load %arg2[%c1, %c0_11, %c0_12] : memref<2x8x128xf32, #tpu.memory_space<vmem>>, vector<1x8x128xf32>
    %34 = vector.shape_cast %33 : vector<1x8x128xf32> to vector<8x128xf32>
    %35 = math.absf %32 : vector<8x128xf32>
    %36 = vector.broadcast %1 : f32 to vector<8x128xf32>
    %37 = arith.mulf %36, %35 : vector<8x128xf32>
    %38 = arith.mulf %37, %28 : vector<8x128xf32>
    %39 = arith.addf %32, %38 : vector<8x128xf32>
    %c0_13 = arith.constant 0 : index
    %c0_14 = arith.constant 0 : index
    %c0_15 = arith.constant 0 : index
    %40 = vector.load %arg4[%c0_13, %c0_14, %c0_15] : memref<2x8x128xf32, #tpu.memory_space<vmem>>, vector<1x8x128xf32>
    %41 = vector.shape_cast %40 : vector<1x8x128xf32> to vector<8x128xf32>
    %42 = vector.shape_cast %39 : vector<8x128xf32> to vector<1x8x128xf32>
    tpu.vector_store %arg4[%c0_13, %c0_14, %c0_15], %42 {strides = array<i32>} : memref<2x8x128xf32, #tpu.memory_space<vmem>>, vector<1x8x128xf32>,
    %43 = math.absf %34 : vector<8x128xf32>
    %44 = vector.broadcast %1 : f32 to vector<8x128xf32>
    %45 = arith.mulf %44, %43 : vector<8x128xf32>
    %46 = arith.mulf %45, %30 : vector<8x128xf32>
    %47 = arith.addf %34, %46 : vector<8x128xf32>
    %c1_16 = arith.constant 1 : index
    %c0_17 = arith.constant 0 : index
    %c0_18 = arith.constant 0 : index
    %48 = vector.load %arg4[%c1_16, %c0_17, %c0_18] : memref<2x8x128xf32, #tpu.memory_space<vmem>>, vector<1x8x128xf32>
    %49 = vector.shape_cast %48 : vector<1x8x128xf32> to vector<8x128xf32>
    %50 = vector.shape_cast %47 : vector<8x128xf32> to vector<1x8x128xf32>
    tpu.vector_store %arg4[%c1_16, %c0_17, %c0_18], %50 {strides = array<i32>} : memref<2x8x128xf32, #tpu.memory_space<vmem>>, vector<1x8x128xf32>,
    return
  }
  func.func @transform_0(%arg0: i32) -> i32 {
    %c0_i32 = arith.constant 0 : i32
    %c0_i32_0 = arith.constant 0 : i32
    return %c0_i32 : i32
  }
  func.func @transform_1(%arg0: i32) -> (i32, i32, i32) {
    %c0_i32 = arith.constant 0 : i32
    %c0_i32_0 = arith.constant 0 : i32
    %c0_i32_1 = arith.constant 0 : i32
    return %c0_i32, %arg0, %c0_i32_0 : i32, i32, i32
  }
  func.func @transform_2(%arg0: i32) -> (i32, i32) {
    %c0_i32 = arith.constant 0 : i32
    %c0_i32_0 = arith.constant 0 : i32
    return %arg0, %c0_i32 : i32, i32
  }
  func.func @transform_3(%arg0: i32) -> (i32, i32, i32) {
    %c0_i32 = arith.constant 0 : i32
    %c0_i32_0 = arith.constant 0 : i32
    %c0_i32_1 = arith.constant 0 : i32
    return %c0_i32, %arg0, %c0_i32_0 : i32, i32, i32
  }
}

</mosaic_0001>

<llo_original>
// kernel: tpu_custom_call.1
$region0: #{tpu_custom_call.1}
  #allocation0 [shape = 'u32[]', space=smem, size = 0x4, offset = 0x4, fixed_abs, tag = 'smem constant byte address 0x4 - core index']
  #allocation1 [shape = 'u32[144,128]{1,0:T(1,128)}', space=vmem, size = 0x12000, scoped, tag = 'internal scratch']
  #allocation2 [shape = 'f32[1]{0:T(128)S(6)}', space=smem, size = 0x200, scoped, tag = 'scoped memory for tpu_custom_call.1']
  %s0 = inlined_call_operand.<no memory space> [shape: f32[1], index: 0, kind: input, shape index: {}]
  %s1 = inlined_call_operand.hbm [shape: f32[2,8,128], index: 1, kind: input, shape index: {}]
  %s2 = inlined_call_operand.hbm [shape: u32[8,128], index: 2, kind: input, shape index: {}]
  %s3 = inlined_call_operand.hbm [shape: f32[2,8,128], index: 3, kind: output, shape index: {}]
  %s4 = sld [smem:[#allocation0]]
  $region30: #{tpu_custom_call.1} parent=0
    _
  %s6 = ssub.s32 1, %s4
  %s7 = scalar_select 0, %s6, %s4
  %8 = sst [smem:[#allocation2]] %s0
  $region1: #{tpu_custom_call.1} parent=0
    #allocation3 [shape = 'u8[8192]{0}', space=vmem, size = 0x2000, scoped, tag = 'input window, operand 1, single buffered']
    #allocation4 [shape = 's32[1]{0}', space=sflag, size = 0x4, scoped, tag = 'scoped memory for tpu_custom_call.1']
    #allocation5 [shape = 's32[1]{0}', space=sflag, size = 0x4, scoped, tag = 'scoped memory for tpu_custom_call.1']
    #allocation6 [shape = 'u8[4096]{0}', space=vmem, size = 0x1000, scoped, tag = 'input window, operand 2, single buffered']
    #allocation7 [shape = 's32[1]{0}', space=sflag, size = 0x4, scoped, tag = 'scoped memory for tpu_custom_call.1']
    #allocation8 [shape = 'u8[8192]{0}', space=vmem, size = 0x2000, scoped, tag = 'output window, operand 0, single buffered']
    %9 = vsyncpa [#allocation4], 0
    %10 = vsyncpa [#allocation7], 0
    %11 = vsyncpa [#allocation5], 0
    // Predicated region
    $region2: #{tpu_custom_call.1} parent=1 // pred_check
      _
    $region3: #{tpu_custom_call.1} parent=1 // pred_check_branch
      %13 = sbr.rel (0) target = $region5
    $region4: #{tpu_custom_call.1} parent=1 // pred_region
      _
    $region5: #{tpu_custom_call.1} parent=1 // pred_fallthru
      _
    // Predicated region
    $region6: #{tpu_custom_call.1} parent=1 // pred_check
      _
    $region7: #{tpu_custom_call.1} parent=1 // pred_check_branch
      %15 = sbr.rel (0) target = $region9
    $region8: #{tpu_custom_call.1} parent=1 // pred_region
      %s17 = ssub.s32 256, 256
      %18 = vsyncadd [#allocation4], %s17
      %s19 = sshll.u32 [#allocation3], 4
      %s20 = int_to_ptr.vmem [resolvable:$true] %s19
      %25 = dma.hbm_to_vmem [thread:$0]  %s1, 256, %s20, [#allocation4], 128, 128, 8
    $region9: #{tpu_custom_call.1} parent=1 // pred_fallthru
      _
    // Predicated region
    $region10: #{tpu_custom_call.1} parent=1 // pred_check
      _
    $region11: #{tpu_custom_call.1} parent=1 // pred_check_branch
      %27 = sbr.rel (0) target = $region13
    $region12: #{tpu_custom_call.1} parent=1 // pred_region
      %s29 = ssub.s32 128, 128
      %30 = vsyncadd [#allocation7], %s29
      %s32 = sshll.u32 [#allocation6], 4
      %s33 = int_to_ptr.vmem [resolvable:$true] %s32
      %35 = dma.hbm_to_vmem [thread:$0]  %s2, 128, %s33, [#allocation7]
    $region13: #{tpu_custom_call.1} parent=1 // pred_fallthru
      _
    // Predicated region
    $region14: #{tpu_custom_call.1} parent=1 // pred_check
      _
    $region15: #{tpu_custom_call.1} parent=1 // pred_check_branch
      %37 = sbr.rel (0) target = $region17
    $region16: #{tpu_custom_call.1} parent=1 // pred_region
      %38 = dma.done [#allocation4], 256
    $region17: #{tpu_custom_call.1} parent=1 // pred_fallthru
      _
    // Predicated region
    $region18: #{tpu_custom_call.1} parent=1 // pred_check
      _
    $region19: #{tpu_custom_call.1} parent=1 // pred_check_branch
      %40 = sbr.rel (0) target = $region21
    $region20: #{tpu_custom_call.1} parent=1 // pred_region
      %41 = dma.done [#allocation7], 128
    $region21: #{tpu_custom_call.1} parent=1 // pred_fallthru
      _
    %s42 = sld [smem:[#allocation2]]
    %s43 = smul.f32 %s42, 0.33333334
    %v44 = vld [vmem:[#allocation6] sm:$0xff]
    %v45 = vshrl.u32 %v44, 16
    %v46 = vshll.u32 %v45, 7
    %v47 = vor.u32 %v46, 1065353216
    %v49 = vand.u32 %v44, 65535
    %v50 = vshll.u32 %v49, 7
    %v51 = vor.u32 %v50, 1065353216
    %v53 = vsub.f32 2.0, %v47
    %v54 = vsub.f32 %v51, 1.0
    %v55 = vmul.f32 %v54, 6.2831855
    %v56 = vlog2.pop %v53
    %v57 = vmul.f32 %v56, 0.6931472
    %v58 = vmul.f32 %v57, -2.0
    %v59 = vrsqrt.pop %v58
    %v60 = vmul.f32 %v58, %v59
    %vm61 = vcmp.eq.f32.partialorder %v58, inf
    %v62 = vsel %vm61, %v58, %v60
    %vm63 = vcmp.eq.f32.partialorder %v58, 0.0
    %v64 = vand.u32 %v58, 2147483648
    %v65 = vsel %vm63, %v64, %v62
    %v66 = vand.u32 2147483647, %v55
    %vm67 = vcmp.le.f32.partialorder %v66, 0.7853982
    %vm68 = vcmp.lt.s32.totalorder %v55, 0
    %v69 = vand.u32 %v55, 2139095040
    %v70 = vshrl.u32 %v69, 23
    %v71 = vsub.s32 %v70, 127
    %v72 = vand.u32 2147483647, %v55
    %v73 = vand.u32 %v72, 8388607
    %v74 = vor.u32 %v73, 8388608
    %v75 = vsub.s32 0, %v74
    %v76 = vadd.s32 %v71, 1
    %vm77 = vcmp.gt.s32.totalorder %v76, 0
    %v78 = vsel %vm77, %v76, 0
    %v79 = vshrl.u32 %v78, 5
    %v80 = vand.u32 %v78, 31
    %v81 = vsub.s32 32, %v80
    %v82 = vshrl.u32 683565275, %v81
    %v83 = vshll.u32 683565275, %v80
    %v84 = vshrl.u32 2475754826, %v81
    %v85 = vor.u32 %v83, %v84
    %v86 = vshll.u32 2475754826, %v80
    %v87 = vshrl.u32 2131351028, %v81
    %v88 = vor.u32 %v86, %v87
    %v89 = vshll.u32 2131351028, %v80
    %v90 = vshrl.u32 2102212464, %v81
    %v91 = vor.u32 %v89, %v90
    %v92 = vshll.u32 2102212464, %v80
    %v93 = vshrl.u32 920167782, %v81
    %v94 = vor.u32 %v92, %v93
    %v95 = vshll.u32 920167782, %v80
    %v96 = vshrl.u32 1326507024, %v81
    %v97 = vor.u32 %v95, %v96
    %vm98 = vcmp.lt.s32.totalorder %v79, 1
    %vm99 = vcmp.lt.s32.totalorder %v79, 2
    %vm100 = vcmp.lt.s32.totalorder %v79, 3
    %vm101 = vcmp.lt.s32.totalorder %v79, 4
    %v102 = vsel %vm98, %v82, %v85
    %v103 = vsel %vm101, %v91, 2102212464
    %v104 = vsel %vm100, %v88, %v103
    %v105 = vsel %vm99, %v102, %v104
    %v106 = vsel %vm98, %v85, %v88
    %v107 = vsel %vm101, %v94, 920167782
    %v108 = vsel %vm100, %v91, %v107
    %v109 = vsel %vm99, %v106, %v108
    %v110 = vsel %vm98, %v88, %v91
    %v111 = vsel %vm101, %v97, 1326507024
    %v112 = vsel %vm100, %v94, %v111
    %v113 = vsel %vm99, %v110, %v112
    %v114 = vshll.u32 %v74, 8
    %v115 = vmul.u32.u64.compose %v114, %v113
    %v116 = vextract.low.u32 %v115
    %v117 = vextract.high.u32 %v115
    %v118 = vmul.u32.u64.compose %v114, %v109
    %v119 = vextract.low.u32 %v118
    %v120 = vextract.high.u32 %v118
    %v121 = vmul.u32 %v114, %v105
    %v122 = vadd.s32 %v117, %v119
    %vm123 = vc.u32 %v117, %v119
    %v124 = vadd.s32 %v120, 1
    %v125 = vsel %vm123, %v124, %v120
    %v126 = vadd.s32 %v121, %v125
    %v127 = vadd.s32 %v126, 536870912
    %v128 = vshrl.u32 %v127, 30
    %v129 = vshll.u32 %v128, 30
    %v130 = vsub.s32 %v126, %v129
    %vm131 = vcmp.lt.s32.totalorder %v130, 0
    %v132 = vsub.s32 0, %v130
    %v133 = vsel %vm131, %v132, %v130
    %v134 = vclz %v133
    %v135 = vsub.s32 %v134, 2
    %vm136 = vcmp.gt.s32.totalorder 0, %v135
    %v137 = vsel %vm136, 0, %v135
    %v138 = vsub.s32 32, %v137
    %v139 = vshll.u32 %v130, %v137
    %v140 = vshrl.u32 %v122, %v138
    %v141 = vor.u32 %v139, %v140
    %v142 = vsub.s32 4294967266, %v137
    %v143 = vadd.s32 %v142, 127
    %v144 = vshll.u32 %v143, 23
    %v145 = vor.u32 4788187, %v144
    %v146 = vand.u32 2147483647, %v145
    %v148 = vcvt.s32.f32 %v141
    %v149 = vmul.f32 %v148, %v146
    %v150 = vxor.u32 %v149, 2147483648
    %v151 = vsel %vm68, %v150, %v149
    %v152 = vsub.s32 4, %v128
    %v153 = vsel %vm68, %v152, %v128
    %v154 = vsel %vm67, %v55, %v151
    %v155 = vsel %vm67, 0, %v153
    %v156 = vcosq.f32.pop %v154
    %v157 = vsinq.f32.pop %v154
    %vm158 = vweird.f32 %v55
    %v159 = vand.u32 %v155, 3
    %vm160 = vcmp.lt.s32.totalorder %v159, 2
    %vm161 = vcmp.eq.s32.totalorder %v159, 0
    %v162 = vxor.u32 %v157, 2147483648
    %v163 = vsel %vm161, %v156, %v162
    %vm164 = vcmp.eq.s32.totalorder %v159, 2
    %v165 = vxor.u32 %v156, 2147483648
    %v166 = vsel %vm164, %v165, %v157
    %v167 = vsel %vm160, %v163, %v166
    %v168 = vsel %vm158, nan, %v167
    %v169 = vmul.f32 %v65, %v168
    %v170 = vand.u32 2147483647, %v55
    %vm171 = vcmp.le.f32.partialorder %v170, 0.7853982
    %vm172 = vcmp.lt.s32.totalorder %v55, 0
    %v173 = vand.u32 %v55, 2139095040
    %v174 = vshrl.u32 %v173, 23
    %v175 = vsub.s32 %v174, 127
    %v176 = vand.u32 2147483647, %v55
    %v177 = vand.u32 %v176, 8388607
    %v178 = vor.u32 %v177, 8388608
    %v179 = vsub.s32 0, %v178
    %v180 = vadd.s32 %v175, 1
    %vm181 = vcmp.gt.s32.totalorder %v180, 0
    %v182 = vsel %vm181, %v180, 0
    %v183 = vshrl.u32 %v182, 5
    %v184 = vand.u32 %v182, 31
    %v185 = vsub.s32 32, %v184
    %v186 = vshrl.u32 683565275, %v185
    %v187 = vshll.u32 683565275, %v184
    %v188 = vshrl.u32 2475754826, %v185
    %v189 = vor.u32 %v187, %v188
    %v190 = vshll.u32 2475754826, %v184
    %v191 = vshrl.u32 2131351028, %v185
    %v192 = vor.u32 %v190, %v191
    %v193 = vshll.u32 2131351028, %v184
    %v194 = vshrl.u32 2102212464, %v185
    %v195 = vor.u32 %v193, %v194
    %v196 = vshll.u32 2102212464, %v184
    %v197 = vshrl.u32 920167782, %v185
    %v198 = vor.u32 %v196, %v197
    %v199 = vshll.u32 920167782, %v184
    %v200 = vshrl.u32 1326507024, %v185
    %v201 = vor.u32 %v199, %v200
    %vm202 = vcmp.lt.s32.totalorder %v183, 1
    %vm203 = vcmp.lt.s32.totalorder %v183, 2
    %vm204 = vcmp.lt.s32.totalorder %v183, 3
    %vm205 = vcmp.lt.s32.totalorder %v183, 4
    %v206 = vsel %vm202, %v186, %v189
    %v207 = vsel %vm205, %v195, 2102212464
    %v208 = vsel %vm204, %v192, %v207
    %v209 = vsel %vm203, %v206, %v208
    %v210 = vsel %vm202, %v189, %v192
    %v211 = vsel %vm205, %v198, 920167782
    %v212 = vsel %vm204, %v195, %v211
    %v213 = vsel %vm203, %v210, %v212
    %v214 = vsel %vm202, %v192, %v195
    %v215 = vsel %vm205, %v201, 1326507024
    %v216 = vsel %vm204, %v198, %v215
    %v217 = vsel %vm203, %v214, %v216
    %v218 = vshll.u32 %v178, 8
    %v219 = vmul.u32.u64.compose %v218, %v217
    %v220 = vextract.low.u32 %v219
    %v221 = vextract.high.u32 %v219
    %v222 = vmul.u32.u64.compose %v218, %v213
    %v223 = vextract.low.u32 %v222
    %v224 = vextract.high.u32 %v222
    %v225 = vmul.u32 %v218, %v209
    %v226 = vadd.s32 %v221, %v223
    %vm227 = vc.u32 %v221, %v223
    %v228 = vadd.s32 %v224, 1
    %v229 = vsel %vm227, %v228, %v224
    %v230 = vadd.s32 %v225, %v229
    %v231 = vadd.s32 %v230, 536870912
    %v232 = vshrl.u32 %v231, 30
    %v233 = vshll.u32 %v232, 30
    %v234 = vsub.s32 %v230, %v233
    %vm235 = vcmp.lt.s32.totalorder %v234, 0
    %v236 = vsub.s32 0, %v234
    %v237 = vsel %vm235, %v236, %v234
    %v238 = vclz %v237
    %v239 = vsub.s32 %v238, 2
    %vm240 = vcmp.gt.s32.totalorder 0, %v239
    %v241 = vsel %vm240, 0, %v239
    %v242 = vsub.s32 32, %v241
    %v243 = vshll.u32 %v234, %v241
    %v244 = vshrl.u32 %v226, %v242
    %v245 = vor.u32 %v243, %v244
    %v246 = vsub.s32 4294967266, %v241
    %v247 = vadd.s32 %v246, 127
    %v248 = vshll.u32 %v247, 23
    %v249 = vor.u32 4788187, %v248
    %v250 = vand.u32 2147483647, %v249
    %v252 = vcvt.s32.f32 %v245
    %v253 = vmul.f32 %v252, %v250
    %v254 = vxor.u32 %v253, 2147483648
    %v255 = vsel %vm172, %v254, %v253
    %v256 = vsub.s32 4, %v232
    %v257 = vsel %vm172, %v256, %v232
    %v258 = vsel %vm171, %v55, %v255
    %v259 = vsel %vm171, 0, %v257
    %v260 = vcosq.f32.pop %v258
    %v261 = vsinq.f32.pop %v258
    %vm262 = vweird.f32 %v55
    %v263 = vadd.s32 %v259, 3
    %v264 = vand.u32 %v263, 3
    %vm265 = vcmp.lt.s32.totalorder %v264, 2
    %vm266 = vcmp.eq.s32.totalorder %v264, 0
    %v267 = vxor.u32 %v261, 2147483648
    %v268 = vsel %vm266, %v260, %v267
    %vm269 = vcmp.eq.s32.totalorder %v264, 2
    %v270 = vxor.u32 %v260, 2147483648
    %v271 = vsel %vm269, %v270, %v261
    %v272 = vsel %vm265, %v268, %v271
    %v273 = vsel %vm262, nan, %v272
    %v274 = vmul.f32 %v65, %v273
    %v275 = vld [vmem:[#allocation3] sm:$0xff]
    %s276 = scalar_lea.vmem [#allocation3], 8
    %v277 = vld [vmem:[%s276] sm:$0xff]
    %v278 = vand.u32 2147483647, %v275
    %v279 = vstv %s43
    %v280 = vmul.f32 %v279, %v278
    %v281 = vmul.f32 %v280, %v169
    %v282 = vadd.f32 %v275, %v281
    %283 = vst [vmem:[#allocation8] sm:$0xff] %v282
    %v284 = vand.u32 2147483647, %v277
    %v285 = vmul.f32 %v279, %v284
    %v286 = vmul.f32 %v285, %v274
    %v287 = vadd.f32 %v277, %v286
    %s288 = scalar_lea.vmem [#allocation8], 8
    %289 = vst [vmem:[%s288] sm:$0xff] %v287
    // Predicated region
    $region22: #{tpu_custom_call.1} parent=1 // pred_check
      _
    $region23: #{tpu_custom_call.1} parent=1 // pred_check_branch
      %291 = sbr.rel (0) target = $region25
    $region24: #{tpu_custom_call.1} parent=1 // pred_region
      %s293 = ssub.s32 256, 256
      %294 = vsyncadd [#allocation5], %s293
      %s295 = sshll.u32 [#allocation8], 4
      %s296 = int_to_ptr.vmem [resolvable:$true] %s295
      %301 = dma.vmem_to_hbm [thread:$0]  %s296, 256, %s3, [#allocation5], 128, 128, 8
    $region25: #{tpu_custom_call.1} parent=1 // pred_fallthru
      _
    // Predicated region
    $region26: #{tpu_custom_call.1} parent=1 // pred_check
      _
    $region27: #{tpu_custom_call.1} parent=1 // pred_check_branch
      %303 = sbr.rel (0) target = $region29
    $region28: #{tpu_custom_call.1} parent=1 // pred_region
      %304 = dma.done [#allocation5], 256
    $region29: #{tpu_custom_call.1} parent=1 // pred_fallthru
      _
    %305 = vsyncpa [#allocation4], 1
    %306 = vsyncpa [#allocation7], 1
    %307 = vsyncpa [#allocation5], 1

</llo_original>
